<compile_context>
chip_gen: v7x
topology: tpu7x:2x2x1
jax: 0.10.0
libtpu: 0.0.40
codegen_flags: <defaults>
</compile_context>

<pallas_src>
import jax
import jax.numpy as jnp
from jax.experimental import pallas as pl
from jax.experimental.pallas import tpu as pltpu


# --------------------------- Model configuration -----------------------------

SPARSE_VOCABS = [10, 20, 30, 40]
EMB_DIM = 8
DENSE_DIM = 4
HIDDEN = 256
INIT_STD = 1e-4
BATCH = 8
BN_EPS = 1e-5

NUM_SPARSE = len(SPARSE_VOCABS)
SPARSE_DIM = NUM_SPARSE * EMB_DIM                      # 32
DNN_INPUT_DIM = SPARSE_DIM + DENSE_DIM                 # 36 (compute_input_dim)
N_COLS = NUM_SPARSE + DENSE_DIM                        # 8 raw input columns
D_PAD = 40                                             # weight rows, mult of 8
V_TOTAL = sum(SPARSE_VOCABS)                           # 100
V_PAD = 128                                            # one lane width
OFFSETS = [0]
for _v in SPARSE_VOCABS[:-1]:
    OFFSETS.append(OFFSETS[-1] + _v)                   # [0, 10, 30, 60]


# ----------------------------- Pallas kernel --------------------------------

def bottom_dnnfm_kernel(x_ref, table_ref, w_ref, gamma_ref, beta_ref, o_ref):
    """Fused: one-hot embedding gather -> bias-free Linear (bias cancels under
    training-mode BN) -> BatchNorm1d (single-pass stats, folded scale/shift)
    -> ReLU.  Everything lives in VMEM; grid=(1,)."""
    x = x_ref[...]                               # (B, 8): [idx0..idx3, dense0..3]
    table = table_ref[...]                       # (V_PAD, EMB_DIM) f32
    w = w_ref[...]                               # (D_PAD, HIDDEN)  f32 (packed)
    b = x.shape[0]

    # Dense part of the Linear: multiply the raw (B, 8) input against the
    # packed rows [32:40) of W, whose first 4 rows are zero (they absorb the
    # index columns exactly) and last 4 rows are the dense weight rows.
    w_dense_blk = w[SPARSE_DIM:SPARSE_DIM + N_COLS, :]                # (8, H)
    y = jnp.dot(x, w_dense_blk, preferred_element_type=jnp.float32)  # (B, H)

    # Sparse features: exact gather as one-hot @ merged table (MXU), then
    # accumulate that feature's slice of the Linear weight.  Mathematically
    # identical to gather -> concat -> x @ W.
    lane = jax.lax.broadcasted_iota(jnp.int32, (b, V_PAD), 1)
    for f in range(NUM_SPARSE):
        idx_f = x[:, f:f + 1].astype(jnp.int32) + OFFSETS[f]          # (B, 1)
        onehot = (lane == idx_f).astype(jnp.float32)                  # (B, V_PAD)
        emb_f = jnp.dot(onehot, table,
                        preferred_element_type=jnp.float32)           # (B, E)
        w_f = w[f * EMB_DIM:(f + 1) * EMB_DIM, :]                     # (E, H)
        y = y + jnp.dot(emb_f, w_f, preferred_element_type=jnp.float32)

    # BatchNorm1d, training mode (biased batch variance), single-pass stats,
    # folded into one scale/shift.  Linear bias omitted: it cancels exactly.
    inv_n = 1.0 / b
    s1 = jnp.sum(y, axis=0, keepdims=True)           # (1, H)
    s2 = jnp.sum(y * y, axis=0, keepdims=True)       # (1, H)
    mean = s1 * inv_n
    var = s2 * inv_n - mean * mean
    scale = gamma_ref[...] * jax.lax.rsqrt(var + BN_EPS)              # (1, H)
    shift = beta_ref[...] - mean * scale                              # (1, H)

    # ReLU (dropout p=0.0 -> identity); lane-dense full-H store.
    o_ref[...] = jnp.maximum(y * scale + shift, 0.0)


def bottom_dnn_fm_forward(X, params):
    """X: (B, NUM_SPARSE + DENSE_DIM) float32.
    Columns [0, NUM_SPARSE) hold sparse indices (as floats),
    columns [NUM_SPARSE, NUM_SPARSE + DENSE_DIM) hold dense values.
    Single pallas_call; no host-side gather/concat ops remain."""
    B = X.shape[0]

    flops = 2 * B * (N_COLS * HIDDEN
                     + NUM_SPARSE * (V_PAD * EMB_DIM + EMB_DIM * HIDDEN)) \
        + 8 * B * HIDDEN
    bytes_accessed = 4 * (B * N_COLS + V_PAD * EMB_DIM + D_PAD * HIDDEN
                          + 2 * HIDDEN + B * HIDDEN)

    grid_spec = pl.GridSpec(
        grid=(1,),
        in_specs=[
            pl.BlockSpec((B, N_COLS), lambda i: (0, 0)),
            pl.BlockSpec((V_PAD, EMB_DIM), lambda i: (0, 0)),
            pl.BlockSpec((D_PAD, HIDDEN), lambda i: (0, 0)),
            pl.BlockSpec((1, HIDDEN), lambda i: (0, 0)),
            pl.BlockSpec((1, HIDDEN), lambda i: (0, 0)),
        ],
        out_specs=pl.BlockSpec((B, HIDDEN), lambda i: (0, 0)),
    )

    return pl.pallas_call(
        bottom_dnnfm_kernel,
        out_shape=jax.ShapeDtypeStruct((B, HIDDEN), jnp.float32),
        grid_spec=grid_spec,
        compiler_params=pltpu.CompilerParams(
            dimension_semantics=("arbitrary",)),
        cost_estimate=pl.CostEstimate(
            flops=int(flops), transcendentals=int(HIDDEN),
            bytes_accessed=int(bytes_accessed)),
    )(X, params["table_pad"], params["w_packed"],
      params["gamma"], params["beta"])


# ------------------------------ Parameters -----------------------------------

def init_params(key):
    keys = jax.random.split(key, NUM_SPARSE + 2)
    emb_tables = [
        jax.random.normal(keys[i], (v, EMB_DIM), jnp.float32) * INIT_STD
        for i, v in enumerate(SPARSE_VOCABS)
    ]
    # DNN Linear(D, H) (scaled up so BN/ReLU is numerically non-trivial here).
    w = jax.random.normal(keys[-2], (DNN_INPUT_DIM, HIDDEN), jnp.float32) * 0.1
    b = jax.random.normal(keys[-1], (HIDDEN,), jnp.float32) * 0.01
    gamma = jnp.ones((1, HIDDEN), jnp.float32)    # BatchNorm1d affine defaults
    beta = jnp.zeros((1, HIDDEN), jnp.float32)

    # --- one-time kernel-ready packing (pure re-layout, no semantic change) --
    # Merged embedding table, zero-padded to one lane width of rows.
    merged = jnp.concatenate(emb_tables, axis=0)                    # (100, 8)
    table_pad = jnp.zeros((V_PAD, EMB_DIM), jnp.float32).at[:V_TOTAL].set(merged)

    # Packed Linear weight, 40 rows:
    #   rows [f*8,(f+1)*8)  -> weight rows for sparse feature f's embedding
    #   rows [32,36)        -> zeros (absorb the raw index columns of X)
    #   rows [36,40)        -> weight rows for the dense features
    w_packed = jnp.zeros((D_PAD, HIDDEN), jnp.float32)
    w_packed = w_packed.at[:SPARSE_DIM].set(w[:SPARSE_DIM])
    w_packed = w_packed.at[SPARSE_DIM + NUM_SPARSE:
                           SPARSE_DIM + NUM_SPARSE + DENSE_DIM].set(w[SPARSE_DIM:])

    return {"emb_tables": emb_tables, "w": w, "b": b,
            "gamma": gamma, "beta": beta,
            "table_pad": table_pad, "w_packed": w_packed}


# --------------------------- Pure-JAX reference -------------------------------

def reference_forward(X, params):
    """Literal translation of the PyTorch forward (with the Linear bias)."""
    embs = []
    for i, table in enumerate(params["emb_tables"]):
        idx = X[:, i].astype(jnp.int32)
        embs.append(jnp.take(table, idx, axis=0))
    dense = X[:, NUM_SPARSE:NUM_SPARSE + DENSE_DIM]
    dnn_in = jnp.concatenate(embs + [dense], axis=1)          # (B, 36)
    y = dnn_in @ params["w"] + params["b"]                    # Linear (with bias)
    mean = jnp.mean(y, axis=0, keepdims=True)
    var = jnp.mean((y - mean) ** 2, axis=0, keepdims=True)    # biased (training)
    y = (y - mean) * jax.lax.rsqrt(var + BN_EPS)
    y = y * params["gamma"] + params["beta"]
    return jnp.maximum(y, 0.0)                                # ReLU, dropout p=0


# ---------------------------------- main -------------------------------------

if __name__ == "__main__":
    key = jax.random.PRNGKey(0)
    k_param, k_idx, k_dense = jax.random.split(key, 3)

    params = init_params(k_param)

    # Model input X: sparse index columns (as floats) + dense value columns.
    idx_cols = []
    for i, v in enumerate(SPARSE_VOCABS):
        ki = jax.random.fold_in(k_idx, i)
        idx_cols.append(
            jax.random.randint(ki, (BATCH, 1), 0, v).astype(jnp.float32))
    dense_cols = jax.random.normal(k_dense, (BATCH, DENSE_DIM), jnp.float32)
    X = jnp.concatenate(idx_cols + [dense_cols], axis=1)      # (8, 8)

    out = jax.block_until_ready(bottom_dnn_fm_forward(X, params))

    assert out.shape == (BATCH, HIDDEN), out.shape
    assert out.dtype == jnp.float32
    assert bool(jnp.all(out >= 0.0)) and bool(jnp.all(jnp.isfinite(out)))

    # Correctness vs. the literal reference (includes the bias -> proves the
    # bias/BN cancellation and the one-hot gather are exact).
    ref = jax.block_until_ready(reference_forward(X, params))
    assert jnp.allclose(out, ref, rtol=2e-3, atol=2e-3), \
        float(jnp.max(jnp.abs(out - ref)))

    print("KERNEL_OK")
</pallas_src>

<mosaic_0001>
module attributes {stable_mosaic.version = 11 : i64} {
  func.func @bottom_dnnfm_kernel(%arg0: i32, %arg1: memref<8x8xf32, #tpu.memory_space<vmem>>, %arg2: memref<128x8xf32, #tpu.memory_space<vmem>>, %arg3: memref<40x256xf32, #tpu.memory_space<vmem>>, %arg4: memref<1x256xf32, #tpu.memory_space<vmem>>, %arg5: memref<1x256xf32, #tpu.memory_space<vmem>>, %arg6: memref<8x256xf32, #tpu.memory_space<vmem>>) attributes {dimension_semantics = [#tpu.dimension_semantics<arbitrary>], iteration_bounds = array<i64: 1>, scalar_prefetch = 0 : i64, scratch_operands = 0 : i64, tpu.core_type = #tpu.core_type<tc>, window_params = [{pipeline_mode = #tpu.pipeline_mode<synchronous>, transform_indices = @transform_0, window_bounds = array<i64: 8, 8>}, {pipeline_mode = #tpu.pipeline_mode<synchronous>, transform_indices = @transform_1, window_bounds = array<i64: 128, 8>}, {pipeline_mode = #tpu.pipeline_mode<synchronous>, transform_indices = @transform_2, window_bounds = array<i64: 40, 256>}, {pipeline_mode = #tpu.pipeline_mode<synchronous>, transform_indices = @transform_3, window_bounds = array<i64: 1, 256>}, {pipeline_mode = #tpu.pipeline_mode<synchronous>, transform_indices = @transform_4, window_bounds = array<i64: 1, 256>}, {pipeline_mode = #tpu.pipeline_mode<synchronous>, transform_indices = @transform_5, window_bounds = array<i64: 8, 256>}]} {
    %c0 = arith.constant 0 : index
    %c0_0 = arith.constant 0 : index
    %0 = vector.load %arg1[%c0, %c0_0] : memref<8x8xf32, #tpu.memory_space<vmem>>, vector<8x8xf32>
    %c0_1 = arith.constant 0 : index
    %c0_2 = arith.constant 0 : index
    %1 = vector.load %arg2[%c0_1, %c0_2] : memref<128x8xf32, #tpu.memory_space<vmem>>, vector<128x8xf32>
    %c0_3 = arith.constant 0 : index
    %c0_4 = arith.constant 0 : index
    %2 = vector.load %arg3[%c0_3, %c0_4] : memref<40x256xf32, #tpu.memory_space<vmem>>, vector<40x256xf32>
    %3 = vector.extract_strided_slice %2 {offsets = [32, 0], sizes = [8, 256], strides = [1, 1]} : vector<40x256xf32> to vector<8x256xf32>
    %cst = arith.constant dense<0.000000e+00> : vector<8x256xf32>
    %4 = tpu.matmul %0, %3, %cst {dimension_numbers = #tpu.dot_dimension_numbers<[1], [0], [0], [1], [0, 0, 1, 1], [], []>} : vector<8x8xf32>, vector<8x256xf32>, vector<8x256xf32> -> vector<8x256xf32>
    %5 = tpu.iota {dimensions = array<i32: 1>} : vector<8x128xi32>
    %6 = vector.extract_strided_slice %0 {offsets = [0, 0], sizes = [8, 1], strides = [1, 1]} : vector<8x8xf32> to vector<8x1xf32>
    %7 = arith.fptosi %6 : vector<8x1xf32> to vector<8x1xi32>
    %c0_i32 = arith.constant 0 : i32
    %8 = vector.broadcast %c0_i32 : i32 to vector<8x1xi32>
    %9 = arith.addi %7, %8 : vector<8x1xi32>
    %10 = vector.broadcast %9 : vector<8x1xi32> to vector<8x128xi32>
    %11 = arith.cmpi eq, %5, %10 : vector<8x128xi32>
    %12 = arith.extui %11 : vector<8x128xi1> to vector<8x128xi32>
    %13 = arith.sitofp %12 : vector<8x128xi32> to vector<8x128xf32>
    %cst_5 = arith.constant dense<0.000000e+00> : vector<8x8xf32>
    %14 = tpu.matmul %13, %1, %cst_5 {dimension_numbers = #tpu.dot_dimension_numbers<[1], [0], [0], [1], [0, 0, 1, 1], [], []>} : vector<8x128xf32>, vector<128x8xf32>, vector<8x8xf32> -> vector<8x8xf32>
    %15 = vector.extract_strided_slice %2 {offsets = [0, 0], sizes = [8, 256], strides = [1, 1]} : vector<40x256xf32> to vector<8x256xf32>
    %cst_6 = arith.constant dense<0.000000e+00> : vector<8x256xf32>
    %16 = tpu.matmul %14, %15, %cst_6 {dimension_numbers = #tpu.dot_dimension_numbers<[1], [0], [0], [1], [0, 0, 1, 1], [], []>} : vector<8x8xf32>, vector<8x256xf32>, vector<8x256xf32> -> vector<8x256xf32>
    %17 = arith.addf %4, %16 : vector<8x256xf32>
    %18 = vector.extract_strided_slice %0 {offsets = [0, 1], sizes = [8, 1], strides = [1, 1]} : vector<8x8xf32> to vector<8x1xf32>
    %19 = arith.fptosi %18 : vector<8x1xf32> to vector<8x1xi32>
    %c10_i32 = arith.constant 10 : i32
    %20 = vector.broadcast %c10_i32 : i32 to vector<8x1xi32>
    %21 = arith.addi %19, %20 : vector<8x1xi32>
    %22 = vector.broadcast %21 : vector<8x1xi32> to vector<8x128xi32>
    %23 = arith.cmpi eq, %5, %22 : vector<8x128xi32>
    %24 = arith.extui %23 : vector<8x128xi1> to vector<8x128xi32>
    %25 = arith.sitofp %24 : vector<8x128xi32> to vector<8x128xf32>
    %cst_7 = arith.constant dense<0.000000e+00> : vector<8x8xf32>
    %26 = tpu.matmul %25, %1, %cst_7 {dimension_numbers = #tpu.dot_dimension_numbers<[1], [0], [0], [1], [0, 0, 1, 1], [], []>} : vector<8x128xf32>, vector<128x8xf32>, vector<8x8xf32> -> vector<8x8xf32>
    %27 = vector.extract_strided_slice %2 {offsets = [8, 0], sizes = [8, 256], strides = [1, 1]} : vector<40x256xf32> to vector<8x256xf32>
    %cst_8 = arith.constant dense<0.000000e+00> : vector<8x256xf32>
    %28 = tpu.matmul %26, %27, %cst_8 {dimension_numbers = #tpu.dot_dimension_numbers<[1], [0], [0], [1], [0, 0, 1, 1], [], []>} : vector<8x8xf32>, vector<8x256xf32>, vector<8x256xf32> -> vector<8x256xf32>
    %29 = arith.addf %17, %28 : vector<8x256xf32>
    %30 = vector.extract_strided_slice %0 {offsets = [0, 2], sizes = [8, 1], strides = [1, 1]} : vector<8x8xf32> to vector<8x1xf32>
    %31 = arith.fptosi %30 : vector<8x1xf32> to vector<8x1xi32>
    %c30_i32 = arith.constant 30 : i32
    %32 = vector.broadcast %c30_i32 : i32 to vector<8x1xi32>
    %33 = arith.addi %31, %32 : vector<8x1xi32>
    %34 = vector.broadcast %33 : vector<8x1xi32> to vector<8x128xi32>
    %35 = arith.cmpi eq, %5, %34 : vector<8x128xi32>
    %36 = arith.extui %35 : vector<8x128xi1> to vector<8x128xi32>
    %37 = arith.sitofp %36 : vector<8x128xi32> to vector<8x128xf32>
    %cst_9 = arith.constant dense<0.000000e+00> : vector<8x8xf32>
    %38 = tpu.matmul %37, %1, %cst_9 {dimension_numbers = #tpu.dot_dimension_numbers<[1], [0], [0], [1], [0, 0, 1, 1], [], []>} : vector<8x128xf32>, vector<128x8xf32>, vector<8x8xf32> -> vector<8x8xf32>
    %39 = vector.extract_strided_slice %2 {offsets = [16, 0], sizes = [8, 256], strides = [1, 1]} : vector<40x256xf32> to vector<8x256xf32>
    %cst_10 = arith.constant dense<0.000000e+00> : vector<8x256xf32>
    %40 = tpu.matmul %38, %39, %cst_10 {dimension_numbers = #tpu.dot_dimension_numbers<[1], [0], [0], [1], [0, 0, 1, 1], [], []>} : vector<8x8xf32>, vector<8x256xf32>, vector<8x256xf32> -> vector<8x256xf32>
    %41 = arith.addf %29, %40 : vector<8x256xf32>
    %42 = vector.extract_strided_slice %0 {offsets = [0, 3], sizes = [8, 1], strides = [1, 1]} : vector<8x8xf32> to vector<8x1xf32>
    %43 = arith.fptosi %42 : vector<8x1xf32> to vector<8x1xi32>
    %c60_i32 = arith.constant 60 : i32
    %44 = vector.broadcast %c60_i32 : i32 to vector<8x1xi32>
    %45 = arith.addi %43, %44 : vector<8x1xi32>
    %46 = vector.broadcast %45 : vector<8x1xi32> to vector<8x128xi32>
    %47 = arith.cmpi eq, %5, %46 : vector<8x128xi32>
    %48 = arith.extui %47 : vector<8x128xi1> to vector<8x128xi32>
    %49 = arith.sitofp %48 : vector<8x128xi32> to vector<8x128xf32>
    %cst_11 = arith.constant dense<0.000000e+00> : vector<8x8xf32>
    %50 = tpu.matmul %49, %1, %cst_11 {dimension_numbers = #tpu.dot_dimension_numbers<[1], [0], [0], [1], [0, 0, 1, 1], [], []>} : vector<8x128xf32>, vector<128x8xf32>, vector<8x8xf32> -> vector<8x8xf32>
    %51 = vector.extract_strided_slice %2 {offsets = [24, 0], sizes = [8, 256], strides = [1, 1]} : vector<40x256xf32> to vector<8x256xf32>
    %cst_12 = arith.constant dense<0.000000e+00> : vector<8x256xf32>
    %52 = tpu.matmul %50, %51, %cst_12 {dimension_numbers = #tpu.dot_dimension_numbers<[1], [0], [0], [1], [0, 0, 1, 1], [], []>} : vector<8x8xf32>, vector<8x256xf32>, vector<8x256xf32> -> vector<8x256xf32>
    %53 = arith.addf %41, %52 : vector<8x256xf32>
    %cst_13 = arith.constant dense<0.000000e+00> : vector<256xf32>
    %54 = vector.multi_reduction <add>, %53, %cst_13 [0] : vector<8x256xf32> to vector<256xf32>
    %55 = vector.shape_cast %54 : vector<256xf32> to vector<1x256xf32>
    %56 = arith.mulf %53, %53 : vector<8x256xf32>
    %cst_14 = arith.constant dense<0.000000e+00> : vector<256xf32>
    %57 = vector.multi_reduction <add>, %56, %cst_14 [0] : vector<8x256xf32> to vector<256xf32>
    %58 = vector.shape_cast %57 : vector<256xf32> to vector<1x256xf32>
    %cst_15 = arith.constant 1.250000e-01 : f32
    %59 = vector.broadcast %cst_15 : f32 to vector<1x256xf32>
    %60 = arith.mulf %55, %59 : vector<1x256xf32>
    %cst_16 = arith.constant 1.250000e-01 : f32
    %61 = vector.broadcast %cst_16 : f32 to vector<1x256xf32>
    %62 = arith.mulf %58, %61 : vector<1x256xf32>
    %63 = arith.mulf %60, %60 : vector<1x256xf32>
    %64 = arith.subf %62, %63 : vector<1x256xf32>
    %c0_17 = arith.constant 0 : index
    %c0_18 = arith.constant 0 : index
    %65 = vector.load %arg4[%c0_17, %c0_18] : memref<1x256xf32, #tpu.memory_space<vmem>>, vector<1x256xf32>
    %cst_19 = arith.constant 9.99999974E-6 : f32
    %66 = vector.broadcast %cst_19 : f32 to vector<1x256xf32>
    %67 = arith.addf %64, %66 : vector<1x256xf32>
    %68 = math.rsqrt %67 : vector<1x256xf32>
    %69 = arith.mulf %65, %68 : vector<1x256xf32>
    %c0_20 = arith.constant 0 : index
    %c0_21 = arith.constant 0 : index
    %70 = vector.load %arg5[%c0_20, %c0_21] : memref<1x256xf32, #tpu.memory_space<vmem>>, vector<1x256xf32>
    %71 = arith.mulf %60, %69 : vector<1x256xf32>
    %72 = arith.subf %70, %71 : vector<1x256xf32>
    %73 = vector.broadcast %69 : vector<1x256xf32> to vector<8x256xf32>
    %74 = arith.mulf %53, %73 : vector<8x256xf32>
    %75 = vector.broadcast %72 : vector<1x256xf32> to vector<8x256xf32>
    %76 = arith.addf %74, %75 : vector<8x256xf32>
    %cst_22 = arith.constant 0.000000e+00 : f32
    %77 = vector.broadcast %cst_22 : f32 to vector<8x256xf32>
    %78 = arith.maximumf %76, %77 : vector<8x256xf32>
    %c0_23 = arith.constant 0 : index
    %c0_24 = arith.constant 0 : index
    %79 = vector.load %arg6[%c0_23, %c0_24] : memref<8x256xf32, #tpu.memory_space<vmem>>, vector<8x256xf32>
    tpu.vector_store %arg6[%c0_23, %c0_24], %78 {strides = array<i32>} : memref<8x256xf32, #tpu.memory_space<vmem>>, vector<8x256xf32>,
    return
  }
  func.func @transform_0(%arg0: i32) -> (i32, i32) {
    %c0_i32 = arith.constant 0 : i32
    %c0_i32_0 = arith.constant 0 : i32
    %c0_i32_1 = arith.constant 0 : i32
    return %c0_i32, %c0_i32_0 : i32, i32
  }
  func.func @transform_1(%arg0: i32) -> (i32, i32) {
    %c0_i32 = arith.constant 0 : i32
    %c0_i32_0 = arith.constant 0 : i32
    %c0_i32_1 = arith.constant 0 : i32
    return %c0_i32, %c0_i32_0 : i32, i32
  }
  func.func @transform_2(%arg0: i32) -> (i32, i32) {
    %c0_i32 = arith.constant 0 : i32
    %c0_i32_0 = arith.constant 0 : i32
    %c0_i32_1 = arith.constant 0 : i32
    return %c0_i32, %c0_i32_0 : i32, i32
  }
  func.func @transform_3(%arg0: i32) -> (i32, i32) {
    %c0_i32 = arith.constant 0 : i32
    %c0_i32_0 = arith.constant 0 : i32
    %c0_i32_1 = arith.constant 0 : i32
    return %c0_i32, %c0_i32_0 : i32, i32
  }
  func.func @transform_4(%arg0: i32) -> (i32, i32) {
    %c0_i32 = arith.constant 0 : i32
    %c0_i32_0 = arith.constant 0 : i32
    %c0_i32_1 = arith.constant 0 : i32
    return %c0_i32, %c0_i32_0 : i32, i32
  }
  func.func @transform_5(%arg0: i32) -> (i32, i32) {
    %c0_i32 = arith.constant 0 : i32
    %c0_i32_0 = arith.constant 0 : i32
    %c0_i32_1 = arith.constant 0 : i32
    return %c0_i32, %c0_i32_0 : i32, i32
  }
}

</mosaic_0001>

<llo_original>
// kernel: tpu_custom_call.1
$region0: #{tpu_custom_call.1}
  #allocation0 [shape = 'u32[]', space=smem, size = 0x4, offset = 0x4, fixed_abs, tag = 'smem constant byte address 0x4 - core index']
  #allocation1 [shape = 'u32[144,128]{1,0:T(1,128)}', space=vmem, size = 0x12000, scoped, tag = 'internal scratch']
  %s0 = inlined_call_operand.vmem [shape: f32[8,8], index: 0, kind: input, shape index: {}]
  %s1 = inlined_call_operand.vmem [shape: f32[128,8], index: 1, kind: input, shape index: {}]
  %s2 = inlined_call_operand.vmem [shape: f32[40,256], index: 2, kind: input, shape index: {}]
  %s3 = inlined_call_operand.vmem [shape: f32[1,256], index: 3, kind: input, shape index: {}]
  %s4 = inlined_call_operand.vmem [shape: f32[1,256], index: 4, kind: input, shape index: {}]
  %s5 = inlined_call_operand.hbm [shape: f32[8,256], index: 5, kind: output, shape index: {}]
  %s6 = sld [smem:[#allocation0]]
  $region30: #{tpu_custom_call.1} parent=0
    _
  %s8 = ssub.s32 1, %s6
  %s9 = scalar_select 0, %s8, %s6
  $region1: #{tpu_custom_call.1} parent=0
    #allocation2 [shape = 'u8[8192]{0}', space=vmem, size = 0x2000, scoped, tag = 'output window, operand 0, single buffered']
    #allocation3 [shape = 's32[1]{0}', space=sflag, size = 0x4, scoped, tag = 'scoped memory for tpu_custom_call.1']
    %10 = vsyncpa [#allocation3], 0
    // Predicated region
    $region2: #{tpu_custom_call.1} parent=1 // pred_check
      _
    $region3: #{tpu_custom_call.1} parent=1 // pred_check_branch
      %12 = sbr.rel (0) target = $region5
    $region4: #{tpu_custom_call.1} parent=1 // pred_region
      _
    $region5: #{tpu_custom_call.1} parent=1 // pred_fallthru
      _
    // Predicated region
    $region6: #{tpu_custom_call.1} parent=1 // pred_check
      _
    $region7: #{tpu_custom_call.1} parent=1 // pred_check_branch
      %14 = sbr.rel (0) target = $region9
    $region8: #{tpu_custom_call.1} parent=1 // pred_region
      _
    $region9: #{tpu_custom_call.1} parent=1 // pred_fallthru
      _
    // Predicated region
    $region10: #{tpu_custom_call.1} parent=1 // pred_check
      _
    $region11: #{tpu_custom_call.1} parent=1 // pred_check_branch
      %16 = sbr.rel (0) target = $region13
    $region12: #{tpu_custom_call.1} parent=1 // pred_region
      _
    $region13: #{tpu_custom_call.1} parent=1 // pred_fallthru
      _
    // Predicated region
    $region14: #{tpu_custom_call.1} parent=1 // pred_check
      _
    $region15: #{tpu_custom_call.1} parent=1 // pred_check_branch
      %18 = sbr.rel (0) target = $region17
    $region16: #{tpu_custom_call.1} parent=1 // pred_region
      _
    $region17: #{tpu_custom_call.1} parent=1 // pred_fallthru
      _
    // Predicated region
    $region18: #{tpu_custom_call.1} parent=1 // pred_check
      _
    $region19: #{tpu_custom_call.1} parent=1 // pred_check_branch
      %20 = sbr.rel (0) target = $region21
    $region20: #{tpu_custom_call.1} parent=1 // pred_region
      _
    $region21: #{tpu_custom_call.1} parent=1 // pred_fallthru
      _
    %v21 = vld [vmem:[%s0] sm:$0xff]
    %v22 = vld [vmem:[%s1] sm:$0xff]
    %v23 = vld [vmem:[%s1 + $0x8] sm:$0xff]
    %v24 = vld [vmem:[%s1 + $0x10] sm:$0xff]
    %v25 = vld [vmem:[%s1 + $0x18] sm:$0xff]
    %v26 = vld [vmem:[%s1 + $0x20] sm:$0xff]
    %v27 = vld [vmem:[%s1 + $0x28] sm:$0xff]
    %v28 = vld [vmem:[%s1 + $0x30] sm:$0xff]
    %v29 = vld [vmem:[%s1 + $0x38] sm:$0xff]
    %v30 = vld [vmem:[%s1 + $0x40] sm:$0xff]
    %v31 = vld [vmem:[%s1 + $0x48] sm:$0xff]
    %v32 = vld [vmem:[%s1 + $0x50] sm:$0xff]
    %v33 = vld [vmem:[%s1 + $0x58] sm:$0xff]
    %v34 = vld [vmem:[%s1 + $0x60] sm:$0xff]
    %v35 = vld [vmem:[%s1 + $0x68] sm:$0xff]
    %v36 = vld [vmem:[%s1 + $0x70] sm:$0xff]
    %v37 = vld [vmem:[%s1 + $0x78] sm:$0xff]
    %v38 = vld [vmem:[%s2] sm:$0xff]
    %v39 = vld [vmem:[%s2 + $0x8] sm:$0xff]
    %v40 = vld [vmem:[%s2 + $0x10] sm:$0xff]
    %v41 = vld [vmem:[%s2 + $0x18] sm:$0xff]
    %v42 = vld [vmem:[%s2 + $0x20] sm:$0xff]
    %v43 = vld [vmem:[%s2 + $0x28] sm:$0xff]
    %v44 = vld [vmem:[%s2 + $0x30] sm:$0xff]
    %v45 = vld [vmem:[%s2 + $0x38] sm:$0xff]
    %v46 = vld [vmem:[%s2 + $0x40] sm:$0xff]
    %v47 = vld [vmem:[%s2 + $0x48] sm:$0xff]
    %v48 = vlaneseq
    %v49 = vand.u32 %v48, 127
    %v50 = vcvt.f32.s32.to.zero.pseudo %v21
    %51 = vset.pattern.permute.xlu0 0
    %52 = vperm.xlu0 %51, %v50
    %v53 = vpop.permute.xlu0 %52
    %vm54 = vcmp.eq.s32.totalorder %v49, %v53
    %v55 = vsel %vm54, 1, 0
    %v56 = vcvt.s32.f32 %v55
    %57 = vmatprep.subr.mxu0 0.0
    %58 = vmatpush1.msra.mxu0 %v22
    %59 = vmatprep.subr.mxu0 0.0
    %60 = vmatpush1.msra.mxu0 %v23
    %61 = vmatprep.subr.mxu0 0.0
    %62 = vmatpush1.msra.mxu0 %v24
    %63 = vmatprep.subr.mxu0 0.0
    %64 = vmatpush1.msra.mxu0 %v25
    %65 = vmatprep.subr.mxu0 0.0
    %66 = vmatpush1.msra.mxu0 %v26
    %67 = vmatprep.subr.mxu0 0.0
    %68 = vmatpush1.msra.mxu0 %v27
    %69 = vmatprep.subr.mxu0 0.0
    %70 = vmatpush1.msra.mxu0 %v28
    %71 = vmatprep.subr.mxu0 0.0
    %72 = vmatpush1.msra.mxu0 %v29
    %73 = vmatprep.subr.mxu0 0.0
    %74 = vmatpush1.msra.mxu0 %v30
    %75 = vmatprep.subr.mxu0 0.0
    %76 = vmatpush1.msra.mxu0 %v31
    %77 = vmatprep.subr.mxu0 0.0
    %78 = vmatpush1.msra.mxu0 %v32
    %79 = vmatprep.subr.mxu0 0.0
    %80 = vmatpush1.msra.mxu0 %v33
    %81 = vmatprep.subr.mxu0 0.0
    %82 = vmatpush1.msra.mxu0 %v34
    %83 = vmatprep.subr.mxu0 0.0
    %84 = vmatpush1.msra.mxu0 %v35
    %85 = vmatprep.subr.mxu0 0.0
    %86 = vmatpush1.msra.mxu0 %v36
    %87 = vmatprep.subr.mxu0 0.0
    %88 = vmatpush1.msra.mxu0 %v37
    %89 = vmatprep.subr.mxu0 0.0
    %90 = vmatpush1.msra.mxu0 0.0
    %91 = vmatprep.subr.mxu0 0.0
    %92 = vmatpush1.msra.mxu0 0.0
    %93 = vmatprep.subr.mxu0 0.0
    %94 = vmatpush1.msra.mxu0 0.0
    %95 = vmatprep.subr.mxu0 0.0
    %96 = vmatpush1.msra.mxu0 0.0
    %97 = vmatprep.subr.mxu0 0.0
    %98 = vmatpush1.msra.mxu0 0.0
    %99 = vmatprep.subr.mxu0 0.0
    %100 = vmatpush1.msra.mxu0 0.0
    %101 = vmatprep.subr.mxu0 0.0
    %102 = vmatpush1.msra.mxu0 0.0
    %103 = vmatprep.subr.mxu0 0.0
    %104 = vmatpush1.msra.mxu0 0.0
    %105 = vmatprep.subr.mxu0 0.0
    %106 = vmatpush1.msra.mxu0 0.0
    %107 = vmatprep.subr.mxu0 0.0
    %108 = vmatpush1.msra.mxu0 0.0
    %109 = vmatprep.subr.mxu0 0.0
    %110 = vmatpush1.msra.mxu0 0.0
    %111 = vmatprep.subr.mxu0 0.0
    %112 = vmatpush1.msra.mxu0 0.0
    %113 = vmatprep.subr.mxu0 0.0
    %114 = vmatpush1.msra.mxu0 0.0
    %115 = vmatprep.subr.mxu0 0.0
    %116 = vmatpush1.msra.mxu0 0.0
    %117 = vmatprep.subr.mxu0 0.0
    %118 = vmatpush1.msra.mxu0 0.0
    %119 = vmatprep.subr.mxu0 0.0
    %120 = vmatpush1.msra.mxu0 0.0
    %121 = vmatprep.mubr.f32.mxu0 0.0
    %122 = vmatmul.mubr.f32.gmra.mrb[0].mxu0 %v56
    %v123 = vpop.f32.mrb[0].mxu0
    %v124 = vadd.f32 0.0, %v123
    %v125 = vpop.f32.mrb[0].mxu0
    %126 = vdwg.mxu0
    %vm127 = vcmask 64512
    %v129 = vsel %vm127, %v124, 0
    %131 = vmatprep.subr.mxu0 %v39
    %132 = vmatpush1.msra.mxu0 %v38
    %133 = vmatprep.subr.mxu0 0.0
    %134 = vmatpush1.msra.mxu0 0.0
    %135 = vmatprep.subr.mxu0 0.0
    %136 = vmatpush1.msra.mxu0 0.0
    %137 = vmatprep.subr.mxu0 0.0
    %138 = vmatpush1.msra.mxu0 0.0
    %139 = vmatprep.subr.mxu0 0.0
    %140 = vmatpush1.msra.mxu0 0.0
    %141 = vmatprep.subr.mxu0 0.0
    %142 = vmatpush1.msra.mxu0 0.0
    %143 = vmatprep.subr.mxu0 0.0
    %144 = vmatpush1.msra.mxu0 0.0
    %145 = vmatprep.subr.mxu0 0.0
    %146 = vmatpush1.msra.mxu0 0.0
    %147 = vmatprep.subr.mxu0 0.0
    %148 = vmatpush1.msra.mxu0 0.0
    %149 = vmatprep.subr.mxu0 0.0
    %150 = vmatpush1.msra.mxu0 0.0
    %151 = vmatprep.subr.mxu0 0.0
    %152 = vmatpush1.msra.mxu0 0.0
    %153 = vmatprep.subr.mxu0 0.0
    %154 = vmatpush1.msra.mxu0 0.0
    %155 = vmatprep.subr.mxu0 0.0
    %156 = vmatpush1.msra.mxu0 0.0
    %157 = vmatprep.subr.mxu0 0.0
    %158 = vmatpush1.msra.mxu0 0.0
    %159 = vmatprep.subr.mxu0 0.0
    %160 = vmatpush1.msra.mxu0 0.0
    %161 = vmatprep.subr.mxu0 0.0
    %162 = vmatpush1.msra.mxu0 0.0
    %163 = vmatprep.subr.mxu0 0.0
    %164 = vmatpush1.msra.mxu0 0.0
    %165 = vmatprep.subr.mxu0 0.0
    %166 = vmatpush1.msra.mxu0 0.0
    %167 = vmatprep.subr.mxu0 0.0
    %168 = vmatpush1.msra.mxu0 0.0
    %169 = vmatprep.subr.mxu0 0.0
    %170 = vmatpush1.msra.mxu0 0.0
    %171 = vmatprep.subr.mxu0 0.0
    %172 = vmatpush1.msra.mxu0 0.0
    %173 = vmatprep.subr.mxu0 0.0
    %174 = vmatpush1.msra.mxu0 0.0
    %175 = vmatprep.subr.mxu0 0.0
    %176 = vmatpush1.msra.mxu0 0.0
    %177 = vmatprep.subr.mxu0 0.0
    %178 = vmatpush1.msra.mxu0 0.0
    %179 = vmatprep.subr.mxu0 0.0
    %180 = vmatpush1.msra.mxu0 0.0
    %181 = vmatprep.subr.mxu0 0.0
    %182 = vmatpush1.msra.mxu0 0.0
    %183 = vmatprep.subr.mxu0 0.0
    %184 = vmatpush1.msra.mxu0 0.0
    %185 = vmatprep.subr.mxu0 0.0
    %186 = vmatpush1.msra.mxu0 0.0
    %187 = vmatprep.subr.mxu0 0.0
    %188 = vmatpush1.msra.mxu0 0.0
    %189 = vmatprep.subr.mxu0 0.0
    %190 = vmatpush1.msra.mxu0 0.0
    %191 = vmatprep.subr.mxu0 0.0
    %192 = vmatpush1.msra.mxu0 0.0
    %193 = vmatprep.subr.mxu0 0.0
    %194 = vmatpush1.msra.mxu0 0.0
    %195 = vmatprep.mubr.f32.mxu0 0.0
    %196 = vmatmul.mubr.f32.gmra.mrb[0].mxu0 %v129
    %v197 = vpop.f32.mrb[0].mxu0
    %v198 = vadd.f32 0.0, %v197
    %v199 = vpop.f32.mrb[0].mxu0
    %v200 = vadd.f32 0.0, %v199
    %201 = vdwg.mxu0
    %v203 = vsel %vm127, %v21, 0
    %205 = vmatprep.subr.mxu0 %v47
    %206 = vmatpush1.msra.mxu0 %v46
    %207 = vmatprep.subr.mxu0 0.0
    %208 = vmatpush1.msra.mxu0 0.0
    %209 = vmatprep.subr.mxu0 0.0
    %210 = vmatpush1.msra.mxu0 0.0
    %211 = vmatprep.subr.mxu0 0.0
    %212 = vmatpush1.msra.mxu0 0.0
    %213 = vmatprep.subr.mxu0 0.0
    %214 = vmatpush1.msra.mxu0 0.0
    %215 = vmatprep.subr.mxu0 0.0
    %216 = vmatpush1.msra.mxu0 0.0
    %217 = vmatprep.subr.mxu0 0.0
    %218 = vmatpush1.msra.mxu0 0.0
    %219 = vmatprep.subr.mxu0 0.0
    %220 = vmatpush1.msra.mxu0 0.0
    %221 = vmatprep.subr.mxu0 0.0
    %222 = vmatpush1.msra.mxu0 0.0
    %223 = vmatprep.subr.mxu0 0.0
    %224 = vmatpush1.msra.mxu0 0.0
    %225 = vmatprep.subr.mxu0 0.0
    %226 = vmatpush1.msra.mxu0 0.0
    %227 = vmatprep.subr.mxu0 0.0
    %228 = vmatpush1.msra.mxu0 0.0
    %229 = vmatprep.subr.mxu0 0.0
    %230 = vmatpush1.msra.mxu0 0.0
    %231 = vmatprep.subr.mxu0 0.0
    %232 = vmatpush1.msra.mxu0 0.0
    %233 = vmatprep.subr.mxu0 0.0
    %234 = vmatpush1.msra.mxu0 0.0
    %235 = vmatprep.subr.mxu0 0.0
    %236 = vmatpush1.msra.mxu0 0.0
    %237 = vmatprep.subr.mxu0 0.0
    %238 = vmatpush1.msra.mxu0 0.0
    %239 = vmatprep.subr.mxu0 0.0
    %240 = vmatpush1.msra.mxu0 0.0
    %241 = vmatprep.subr.mxu0 0.0
    %242 = vmatpush1.msra.mxu0 0.0
    %243 = vmatprep.subr.mxu0 0.0
    %244 = vmatpush1.msra.mxu0 0.0
    %245 = vmatprep.subr.mxu0 0.0
    %246 = vmatpush1.msra.mxu0 0.0
    %247 = vmatprep.subr.mxu0 0.0
    %248 = vmatpush1.msra.mxu0 0.0
    %249 = vmatprep.subr.mxu0 0.0
    %250 = vmatpush1.msra.mxu0 0.0
    %251 = vmatprep.subr.mxu0 0.0
    %252 = vmatpush1.msra.mxu0 0.0
    %253 = vmatprep.subr.mxu0 0.0
    %254 = vmatpush1.msra.mxu0 0.0
    %255 = vmatprep.subr.mxu0 0.0
    %256 = vmatpush1.msra.mxu0 0.0
    %257 = vmatprep.subr.mxu0 0.0
    %258 = vmatpush1.msra.mxu0 0.0
    %259 = vmatprep.subr.mxu0 0.0
    %260 = vmatpush1.msra.mxu0 0.0
    %261 = vmatprep.subr.mxu0 0.0
    %262 = vmatpush1.msra.mxu0 0.0
    %263 = vmatprep.subr.mxu0 0.0
    %264 = vmatpush1.msra.mxu0 0.0
    %265 = vmatprep.subr.mxu0 0.0
    %266 = vmatpush1.msra.mxu0 0.0
    %267 = vmatprep.subr.mxu0 0.0
    %268 = vmatpush1.msra.mxu0 0.0
    %269 = vmatprep.mubr.f32.mxu0 0.0
    %270 = vmatmul.mubr.f32.gmra.mrb[0].mxu0 %v203
    %v271 = vpop.f32.mrb[0].mxu0
    %v272 = vadd.f32 %v198, %v271
    %v273 = vpop.f32.mrb[0].mxu0
    %v274 = vadd.f32 %v200, %v273
    %275 = vdwg.mxu0
    %v276 = vadd.s32 %v50, 10
    %277 = vset.pattern.permute.xlu0 1
    %278 = vperm.xlu0 %277, %v276
    %v279 = vpop.permute.xlu0 %278
    %vm280 = vcmp.eq.s32.totalorder %v49, %v279
    %v281 = vsel %vm280, 1, 0
    %v282 = vcvt.s32.f32 %v281
    %283 = vmatprep.subr.mxu0 0.0
    %284 = vmatpush1.msra.mxu0 %v22
    %285 = vmatprep.subr.mxu0 0.0
    %286 = vmatpush1.msra.mxu0 %v23
    %287 = vmatprep.subr.mxu0 0.0
    %288 = vmatpush1.msra.mxu0 %v24
    %289 = vmatprep.subr.mxu0 0.0
    %290 = vmatpush1.msra.mxu0 %v25
    %291 = vmatprep.subr.mxu0 0.0
    %292 = vmatpush1.msra.mxu0 %v26
    %293 = vmatprep.subr.mxu0 0.0
    %294 = vmatpush1.msra.mxu0 %v27
    %295 = vmatprep.subr.mxu0 0.0
    %296 = vmatpush1.msra.mxu0 %v28
    %297 = vmatprep.subr.mxu0 0.0
    %298 = vmatpush1.msra.mxu0 %v29
    %299 = vmatprep.subr.mxu0 0.0
    %300 = vmatpush1.msra.mxu0 %v30
    %301 = vmatprep.subr.mxu0 0.0
    %302 = vmatpush1.msra.mxu0 %v31
    %303 = vmatprep.subr.mxu0 0.0
    %304 = vmatpush1.msra.mxu0 %v32
    %305 = vmatprep.subr.mxu0 0.0
    %306 = vmatpush1.msra.mxu0 %v33
    %307 = vmatprep.subr.mxu0 0.0
    %308 = vmatpush1.msra.mxu0 %v34
    %309 = vmatprep.subr.mxu0 0.0
    %310 = vmatpush1.msra.mxu0 %v35
    %311 = vmatprep.subr.mxu0 0.0
    %312 = vmatpush1.msra.mxu0 %v36
    %313 = vmatprep.subr.mxu0 0.0
    %314 = vmatpush1.msra.mxu0 %v37
    %315 = vmatprep.subr.mxu0 0.0
    %316 = vmatpush1.msra.mxu0 0.0
    %317 = vmatprep.subr.mxu0 0.0
    %318 = vmatpush1.msra.mxu0 0.0
    %319 = vmatprep.subr.mxu0 0.0
    %320 = vmatpush1.msra.mxu0 0.0
    %321 = vmatprep.subr.mxu0 0.0
    %322 = vmatpush1.msra.mxu0 0.0
    %323 = vmatprep.subr.mxu0 0.0
    %324 = vmatpush1.msra.mxu0 0.0
    %325 = vmatprep.subr.mxu0 0.0
    %326 = vmatpush1.msra.mxu0 0.0
    %327 = vmatprep.subr.mxu0 0.0
    %328 = vmatpush1.msra.mxu0 0.0
    %329 = vmatprep.subr.mxu0 0.0
    %330 = vmatpush1.msra.mxu0 0.0
    %331 = vmatprep.subr.mxu0 0.0
    %332 = vmatpush1.msra.mxu0 0.0
    %333 = vmatprep.subr.mxu0 0.0
    %334 = vmatpush1.msra.mxu0 0.0
    %335 = vmatprep.subr.mxu0 0.0
    %336 = vmatpush1.msra.mxu0 0.0
    %337 = vmatprep.subr.mxu0 0.0
    %338 = vmatpush1.msra.mxu0 0.0
    %339 = vmatprep.subr.mxu0 0.0
    %340 = vmatpush1.msra.mxu0 0.0
    %341 = vmatprep.subr.mxu0 0.0
    %342 = vmatpush1.msra.mxu0 0.0
    %343 = vmatprep.subr.mxu0 0.0
    %344 = vmatpush1.msra.mxu0 0.0
    %345 = vmatprep.subr.mxu0 0.0
    %346 = vmatpush1.msra.mxu0 0.0
    %347 = vmatprep.mubr.f32.mxu0 0.0
    %348 = vmatmul.mubr.f32.gmra.mrb[0].mxu0 %v282
    %v349 = vpop.f32.mrb[0].mxu0
    %v350 = vadd.f32 0.0, %v349
    %v351 = vpop.f32.mrb[0].mxu0
    %352 = vdwg.mxu0
    %v354 = vsel %vm127, %v350, 0
    %356 = vmatprep.subr.mxu0 %v41
    %357 = vmatpush1.msra.mxu0 %v40
    %358 = vmatprep.subr.mxu0 0.0
    %359 = vmatpush1.msra.mxu0 0.0
    %360 = vmatprep.subr.mxu0 0.0
    %361 = vmatpush1.msra.mxu0 0.0
    %362 = vmatprep.subr.mxu0 0.0
    %363 = vmatpush1.msra.mxu0 0.0
    %364 = vmatprep.subr.mxu0 0.0
    %365 = vmatpush1.msra.mxu0 0.0
    %366 = vmatprep.subr.mxu0 0.0
    %367 = vmatpush1.msra.mxu0 0.0
    %368 = vmatprep.subr.mxu0 0.0
    %369 = vmatpush1.msra.mxu0 0.0
    %370 = vmatprep.subr.mxu0 0.0
    %371 = vmatpush1.msra.mxu0 0.0
    %372 = vmatprep.subr.mxu0 0.0
    %373 = vmatpush1.msra.mxu0 0.0
    %374 = vmatprep.subr.mxu0 0.0
    %375 = vmatpush1.msra.mxu0 0.0
    %376 = vmatprep.subr.mxu0 0.0
    %377 = vmatpush1.msra.mxu0 0.0
    %378 = vmatprep.subr.mxu0 0.0
    %379 = vmatpush1.msra.mxu0 0.0
    %380 = vmatprep.subr.mxu0 0.0
    %381 = vmatpush1.msra.mxu0 0.0
    %382 = vmatprep.subr.mxu0 0.0
    %383 = vmatpush1.msra.mxu0 0.0
    %384 = vmatprep.subr.mxu0 0.0
    %385 = vmatpush1.msra.mxu0 0.0
    %386 = vmatprep.subr.mxu0 0.0
    %387 = vmatpush1.msra.mxu0 0.0
    %388 = vmatprep.subr.mxu0 0.0
    %389 = vmatpush1.msra.mxu0 0.0
    %390 = vmatprep.subr.mxu0 0.0
    %391 = vmatpush1.msra.mxu0 0.0
    %392 = vmatprep.subr.mxu0 0.0
    %393 = vmatpush1.msra.mxu0 0.0
    %394 = vmatprep.subr.mxu0 0.0
    %395 = vmatpush1.msra.mxu0 0.0
    %396 = vmatprep.subr.mxu0 0.0
    %397 = vmatpush1.msra.mxu0 0.0
    %398 = vmatprep.subr.mxu0 0.0
    %399 = vmatpush1.msra.mxu0 0.0
    %400 = vmatprep.subr.mxu0 0.0
    %401 = vmatpush1.msra.mxu0 0.0
    %402 = vmatprep.subr.mxu0 0.0
    %403 = vmatpush1.msra.mxu0 0.0
    %404 = vmatprep.subr.mxu0 0.0
    %405 = vmatpush1.msra.mxu0 0.0
    %406 = vmatprep.subr.mxu0 0.0
    %407 = vmatpush1.msra.mxu0 0.0
    %408 = vmatprep.subr.mxu0 0.0
    %409 = vmatpush1.msra.mxu0 0.0
    %410 = vmatprep.subr.mxu0 0.0
    %411 = vmatpush1.msra.mxu0 0.0
    %412 = vmatprep.subr.mxu0 0.0
    %413 = vmatpush1.msra.mxu0 0.0
    %414 = vmatprep.subr.mxu0 0.0
    %415 = vmatpush1.msra.mxu0 0.0
    %416 = vmatprep.subr.mxu0 0.0
    %417 = vmatpush1.msra.mxu0 0.0
    %418 = vmatprep.subr.mxu0 0.0
    %419 = vmatpush1.msra.mxu0 0.0
    %420 = vmatprep.mubr.f32.mxu0 0.0
    %421 = vmatmul.mubr.f32.gmra.mrb[0].mxu0 %v354
    %v422 = vpop.f32.mrb[0].mxu0
    %v423 = vadd.f32 0.0, %v422
    %v424 = vpop.f32.mrb[0].mxu0
    %v425 = vadd.f32 0.0, %v424
    %426 = vdwg.mxu0
    %v427 = vadd.f32 %v272, %v423
    %v428 = vadd.f32 %v274, %v425
    %v429 = vadd.s32 %v50, 30
    %430 = vset.pattern.permute.xlu0 2
    %431 = vperm.xlu0 %430, %v429
    %v432 = vpop.permute.xlu0 %431
    %vm433 = vcmp.eq.s32.totalorder %v49, %v432
    %v434 = vsel %vm433, 1, 0
    %v435 = vcvt.s32.f32 %v434
    %436 = vmatprep.subr.mxu0 0.0
    %437 = vmatpush1.msra.mxu0 %v22
    %438 = vmatprep.subr.mxu0 0.0
    %439 = vmatpush1.msra.mxu0 %v23
    %440 = vmatprep.subr.mxu0 0.0
    %441 = vmatpush1.msra.mxu0 %v24
    %442 = vmatprep.subr.mxu0 0.0
    %443 = vmatpush1.msra.mxu0 %v25
    %444 = vmatprep.subr.mxu0 0.0
    %445 = vmatpush1.msra.mxu0 %v26
    %446 = vmatprep.subr.mxu0 0.0
    %447 = vmatpush1.msra.mxu0 %v27
    %448 = vmatprep.subr.mxu0 0.0
    %449 = vmatpush1.msra.mxu0 %v28
    %450 = vmatprep.subr.mxu0 0.0
    %451 = vmatpush1.msra.mxu0 %v29
    %452 = vmatprep.subr.mxu0 0.0
    %453 = vmatpush1.msra.mxu0 %v30
    %454 = vmatprep.subr.mxu0 0.0
    %455 = vmatpush1.msra.mxu0 %v31
    %456 = vmatprep.subr.mxu0 0.0
    %457 = vmatpush1.msra.mxu0 %v32
    %458 = vmatprep.subr.mxu0 0.0
    %459 = vmatpush1.msra.mxu0 %v33
    %460 = vmatprep.subr.mxu0 0.0
    %461 = vmatpush1.msra.mxu0 %v34
    %462 = vmatprep.subr.mxu0 0.0
    %463 = vmatpush1.msra.mxu0 %v35
    %464 = vmatprep.subr.mxu0 0.0
    %465 = vmatpush1.msra.mxu0 %v36
    %466 = vmatprep.subr.mxu0 0.0
    %467 = vmatpush1.msra.mxu0 %v37
    %468 = vmatprep.subr.mxu0 0.0
    %469 = vmatpush1.msra.mxu0 0.0
    %470 = vmatprep.subr.mxu0 0.0
    %471 = vmatpush1.msra.mxu0 0.0
    %472 = vmatprep.subr.mxu0 0.0
    %473 = vmatpush1.msra.mxu0 0.0
    %474 = vmatprep.subr.mxu0 0.0
    %475 = vmatpush1.msra.mxu0 0.0
    %476 = vmatprep.subr.mxu0 0.0
    %477 = vmatpush1.msra.mxu0 0.0
    %478 = vmatprep.subr.mxu0 0.0
    %479 = vmatpush1.msra.mxu0 0.0
    %480 = vmatprep.subr.mxu0 0.0
    %481 = vmatpush1.msra.mxu0 0.0
    %482 = vmatprep.subr.mxu0 0.0
    %483 = vmatpush1.msra.mxu0 0.0
    %484 = vmatprep.subr.mxu0 0.0
    %485 = vmatpush1.msra.mxu0 0.0
    %486 = vmatprep.subr.mxu0 0.0
    %487 = vmatpush1.msra.mxu0 0.0
    %488 = vmatprep.subr.mxu0 0.0
    %489 = vmatpush1.msra.mxu0 0.0
    %490 = vmatprep.subr.mxu0 0.0
    %491 = vmatpush1.msra.mxu0 0.0
    %492 = vmatprep.subr.mxu0 0.0
    %493 = vmatpush1.msra.mxu0 0.0
    %494 = vmatprep.subr.mxu0 0.0
    %495 = vmatpush1.msra.mxu0 0.0
    %496 = vmatprep.subr.mxu0 0.0
    %497 = vmatpush1.msra.mxu0 0.0
    %498 = vmatprep.subr.mxu0 0.0
    %499 = vmatpush1.msra.mxu0 0.0
    %500 = vmatprep.mubr.f32.mxu0 0.0
    %501 = vmatmul.mubr.f32.gmra.mrb[0].mxu0 %v435
    %v502 = vpop.f32.mrb[0].mxu0
    %v503 = vadd.f32 0.0, %v502
    %v504 = vpop.f32.mrb[0].mxu0
    %505 = vdwg.mxu0
    %v507 = vsel %vm127, %v503, 0
    %509 = vmatprep.subr.mxu0 %v43
    %510 = vmatpush1.msra.mxu0 %v42
    %511 = vmatprep.subr.mxu0 0.0
    %512 = vmatpush1.msra.mxu0 0.0
    %513 = vmatprep.subr.mxu0 0.0
    %514 = vmatpush1.msra.mxu0 0.0
    %515 = vmatprep.subr.mxu0 0.0
    %516 = vmatpush1.msra.mxu0 0.0
    %517 = vmatprep.subr.mxu0 0.0
    %518 = vmatpush1.msra.mxu0 0.0
    %519 = vmatprep.subr.mxu0 0.0
    %520 = vmatpush1.msra.mxu0 0.0
    %521 = vmatprep.subr.mxu0 0.0
    %522 = vmatpush1.msra.mxu0 0.0
    %523 = vmatprep.subr.mxu0 0.0
    %524 = vmatpush1.msra.mxu0 0.0
    %525 = vmatprep.subr.mxu0 0.0
    %526 = vmatpush1.msra.mxu0 0.0
    %527 = vmatprep.subr.mxu0 0.0
    %528 = vmatpush1.msra.mxu0 0.0
    %529 = vmatprep.subr.mxu0 0.0
    %530 = vmatpush1.msra.mxu0 0.0
    %531 = vmatprep.subr.mxu0 0.0
    %532 = vmatpush1.msra.mxu0 0.0
    %533 = vmatprep.subr.mxu0 0.0
    %534 = vmatpush1.msra.mxu0 0.0
    %535 = vmatprep.subr.mxu0 0.0
    %536 = vmatpush1.msra.mxu0 0.0
    %537 = vmatprep.subr.mxu0 0.0
    %538 = vmatpush1.msra.mxu0 0.0
    %539 = vmatprep.subr.mxu0 0.0
    %540 = vmatpush1.msra.mxu0 0.0
    %541 = vmatprep.subr.mxu0 0.0
    %542 = vmatpush1.msra.mxu0 0.0
    %543 = vmatprep.subr.mxu0 0.0
    %544 = vmatpush1.msra.mxu0 0.0
    %545 = vmatprep.subr.mxu0 0.0
    %546 = vmatpush1.msra.mxu0 0.0
    %547 = vmatprep.subr.mxu0 0.0
    %548 = vmatpush1.msra.mxu0 0.0
    %549 = vmatprep.subr.mxu0 0.0
    %550 = vmatpush1.msra.mxu0 0.0
    %551 = vmatprep.subr.mxu0 0.0
    %552 = vmatpush1.msra.mxu0 0.0
    %553 = vmatprep.subr.mxu0 0.0
    %554 = vmatpush1.msra.mxu0 0.0
    %555 = vmatprep.subr.mxu0 0.0
    %556 = vmatpush1.msra.mxu0 0.0
    %557 = vmatprep.subr.mxu0 0.0
    %558 = vmatpush1.msra.mxu0 0.0
    %559 = vmatprep.subr.mxu0 0.0
    %560 = vmatpush1.msra.mxu0 0.0
    %561 = vmatprep.subr.mxu0 0.0
    %562 = vmatpush1.msra.mxu0 0.0
    %563 = vmatprep.subr.mxu0 0.0
    %564 = vmatpush1.msra.mxu0 0.0
    %565 = vmatprep.subr.mxu0 0.0
    %566 = vmatpush1.msra.mxu0 0.0
    %567 = vmatprep.subr.mxu0 0.0
    %568 = vmatpush1.msra.mxu0 0.0
    %569 = vmatprep.subr.mxu0 0.0
    %570 = vmatpush1.msra.mxu0 0.0
    %571 = vmatprep.subr.mxu0 0.0
    %572 = vmatpush1.msra.mxu0 0.0
    %573 = vmatprep.mubr.f32.mxu0 0.0
    %574 = vmatmul.mubr.f32.gmra.mrb[0].mxu0 %v507
    %v575 = vpop.f32.mrb[0].mxu0
    %v576 = vadd.f32 0.0, %v575
    %v577 = vpop.f32.mrb[0].mxu0
    %v578 = vadd.f32 0.0, %v577
    %579 = vdwg.mxu0
    %v580 = vadd.f32 %v427, %v576
    %v581 = vadd.f32 %v428, %v578
    %v582 = vadd.s32 %v50, 60
    %583 = vset.pattern.permute.xlu0 3
    %584 = vperm.xlu0 %583, %v582
    %v585 = vpop.permute.xlu0 %584
    %vm586 = vcmp.eq.s32.totalorder %v49, %v585
    %v587 = vsel %vm586, 1, 0
    %v588 = vcvt.s32.f32 %v587
    %589 = vmatprep.subr.mxu0 0.0
    %590 = vmatpush1.msra.mxu0 %v22
    %591 = vmatprep.subr.mxu0 0.0
    %592 = vmatpush1.msra.mxu0 %v23
    %593 = vmatprep.subr.mxu0 0.0
    %594 = vmatpush1.msra.mxu0 %v24
    %595 = vmatprep.subr.mxu0 0.0
    %596 = vmatpush1.msra.mxu0 %v25
    %597 = vmatprep.subr.mxu0 0.0
    %598 = vmatpush1.msra.mxu0 %v26
    %599 = vmatprep.subr.mxu0 0.0
    %600 = vmatpush1.msra.mxu0 %v27
    %601 = vmatprep.subr.mxu0 0.0
    %602 = vmatpush1.msra.mxu0 %v28
    %603 = vmatprep.subr.mxu0 0.0
    %604 = vmatpush1.msra.mxu0 %v29
    %605 = vmatprep.subr.mxu0 0.0
    %606 = vmatpush1.msra.mxu0 %v30
    %607 = vmatprep.subr.mxu0 0.0
    %608 = vmatpush1.msra.mxu0 %v31
    %609 = vmatprep.subr.mxu0 0.0
    %610 = vmatpush1.msra.mxu0 %v32
    %611 = vmatprep.subr.mxu0 0.0
    %612 = vmatpush1.msra.mxu0 %v33
    %613 = vmatprep.subr.mxu0 0.0
    %614 = vmatpush1.msra.mxu0 %v34
    %615 = vmatprep.subr.mxu0 0.0
    %616 = vmatpush1.msra.mxu0 %v35
    %617 = vmatprep.subr.mxu0 0.0
    %618 = vmatpush1.msra.mxu0 %v36
    %619 = vmatprep.subr.mxu0 0.0
    %620 = vmatpush1.msra.mxu0 %v37
    %621 = vmatprep.subr.mxu0 0.0
    %622 = vmatpush1.msra.mxu0 0.0
    %623 = vmatprep.subr.mxu0 0.0
    %624 = vmatpush1.msra.mxu0 0.0
    %625 = vmatprep.subr.mxu0 0.0
    %626 = vmatpush1.msra.mxu0 0.0
    %627 = vmatprep.subr.mxu0 0.0
    %628 = vmatpush1.msra.mxu0 0.0
    %629 = vmatprep.subr.mxu0 0.0
    %630 = vmatpush1.msra.mxu0 0.0
    %631 = vmatprep.subr.mxu0 0.0
    %632 = vmatpush1.msra.mxu0 0.0
    %633 = vmatprep.subr.mxu0 0.0
    %634 = vmatpush1.msra.mxu0 0.0
    %635 = vmatprep.subr.mxu0 0.0
    %636 = vmatpush1.msra.mxu0 0.0
    %637 = vmatprep.subr.mxu0 0.0
    %638 = vmatpush1.msra.mxu0 0.0
    %639 = vmatprep.subr.mxu0 0.0
    %640 = vmatpush1.msra.mxu0 0.0
    %641 = vmatprep.subr.mxu0 0.0
    %642 = vmatpush1.msra.mxu0 0.0
    %643 = vmatprep.subr.mxu0 0.0
    %644 = vmatpush1.msra.mxu0 0.0
    %645 = vmatprep.subr.mxu0 0.0
    %646 = vmatpush1.msra.mxu0 0.0
    %647 = vmatprep.subr.mxu0 0.0
    %648 = vmatpush1.msra.mxu0 0.0
    %649 = vmatprep.subr.mxu0 0.0
    %650 = vmatpush1.msra.mxu0 0.0
    %651 = vmatprep.subr.mxu0 0.0
    %652 = vmatpush1.msra.mxu0 0.0
    %653 = vmatprep.mubr.f32.mxu0 0.0
    %654 = vmatmul.mubr.f32.gmra.mrb[0].mxu0 %v588
    %v655 = vpop.f32.mrb[0].mxu0
    %v656 = vadd.f32 0.0, %v655
    %v657 = vpop.f32.mrb[0].mxu0
    %658 = vdwg.mxu0
    %v660 = vsel %vm127, %v656, 0
    %662 = vmatprep.subr.mxu0 %v45
    %663 = vmatpush1.msra.mxu0 %v44
    %664 = vmatprep.subr.mxu0 0.0
    %665 = vmatpush1.msra.mxu0 0.0
    %666 = vmatprep.subr.mxu0 0.0
    %667 = vmatpush1.msra.mxu0 0.0
    %668 = vmatprep.subr.mxu0 0.0
    %669 = vmatpush1.msra.mxu0 0.0
    %670 = vmatprep.subr.mxu0 0.0
    %671 = vmatpush1.msra.mxu0 0.0
    %672 = vmatprep.subr.mxu0 0.0
    %673 = vmatpush1.msra.mxu0 0.0
    %674 = vmatprep.subr.mxu0 0.0
    %675 = vmatpush1.msra.mxu0 0.0
    %676 = vmatprep.subr.mxu0 0.0
    %677 = vmatpush1.msra.mxu0 0.0
    %678 = vmatprep.subr.mxu0 0.0
    %679 = vmatpush1.msra.mxu0 0.0
    %680 = vmatprep.subr.mxu0 0.0
    %681 = vmatpush1.msra.mxu0 0.0
    %682 = vmatprep.subr.mxu0 0.0
    %683 = vmatpush1.msra.mxu0 0.0
    %684 = vmatprep.subr.mxu0 0.0
    %685 = vmatpush1.msra.mxu0 0.0
    %686 = vmatprep.subr.mxu0 0.0
    %687 = vmatpush1.msra.mxu0 0.0
    %688 = vmatprep.subr.mxu0 0.0
    %689 = vmatpush1.msra.mxu0 0.0
    %690 = vmatprep.subr.mxu0 0.0
    %691 = vmatpush1.msra.mxu0 0.0
    %692 = vmatprep.subr.mxu0 0.0
    %693 = vmatpush1.msra.mxu0 0.0
    %694 = vmatprep.subr.mxu0 0.0
    %695 = vmatpush1.msra.mxu0 0.0
    %696 = vmatprep.subr.mxu0 0.0
    %697 = vmatpush1.msra.mxu0 0.0
    %698 = vmatprep.subr.mxu0 0.0
    %699 = vmatpush1.msra.mxu0 0.0
    %700 = vmatprep.subr.mxu0 0.0
    %701 = vmatpush1.msra.mxu0 0.0
    %702 = vmatprep.subr.mxu0 0.0
    %703 = vmatpush1.msra.mxu0 0.0
    %704 = vmatprep.subr.mxu0 0.0
    %705 = vmatpush1.msra.mxu0 0.0
    %706 = vmatprep.subr.mxu0 0.0
    %707 = vmatpush1.msra.mxu0 0.0
    %708 = vmatprep.subr.mxu0 0.0
    %709 = vmatpush1.msra.mxu0 0.0
    %710 = vmatprep.subr.mxu0 0.0
    %711 = vmatpush1.msra.mxu0 0.0
    %712 = vmatprep.subr.mxu0 0.0
    %713 = vmatpush1.msra.mxu0 0.0
    %714 = vmatprep.subr.mxu0 0.0
    %715 = vmatpush1.msra.mxu0 0.0
    %716 = vmatprep.subr.mxu0 0.0
    %717 = vmatpush1.msra.mxu0 0.0
    %718 = vmatprep.subr.mxu0 0.0
    %719 = vmatpush1.msra.mxu0 0.0
    %720 = vmatprep.subr.mxu0 0.0
    %721 = vmatpush1.msra.mxu0 0.0
    %722 = vmatprep.subr.mxu0 0.0
    %723 = vmatpush1.msra.mxu0 0.0
    %724 = vmatprep.subr.mxu0 0.0
    %725 = vmatpush1.msra.mxu0 0.0
    %726 = vmatprep.mubr.f32.mxu0 0.0
    %727 = vmatmul.mubr.f32.gmra.mrb[0].mxu0 %v660
    %v728 = vpop.f32.mrb[0].mxu0
    %v729 = vadd.f32 0.0, %v728
    %v730 = vpop.f32.mrb[0].mxu0
    %v731 = vadd.f32 0.0, %v730
    %732 = vdwg.mxu0
    %v733 = vadd.f32 %v580, %v729
    %v734 = vadd.f32 %v581, %v731
    %v735 = vrot.slane %v733, 4
    %v736 = vadd.f32 %v733, %v735
    %v737 = vrot.slane %v736, 2
    %v738 = vadd.f32 %v736, %v737
    %v739 = vrot.slane %v738, 1
    %v740 = vadd.f32 %v738, %v739
    %v741 = vrot.slane %v734, 4
    %v742 = vadd.f32 %v734, %v741
    %v743 = vrot.slane %v742, 2
    %v744 = vadd.f32 %v742, %v743
    %v745 = vrot.slane %v744, 1
    %v746 = vadd.f32 %v744, %v745
    %v747 = vmul.f32 %v733, %v733
    %v748 = vmul.f32 %v734, %v734
    %v749 = vrot.slane %v747, 4
    %v750 = vadd.f32 %v747, %v749
    %v751 = vrot.slane %v750, 2
    %v752 = vadd.f32 %v750, %v751
    %v753 = vrot.slane %v752, 1
    %v754 = vadd.f32 %v752, %v753
    %v755 = vrot.slane %v748, 4
    %v756 = vadd.f32 %v748, %v755
    %v757 = vrot.slane %v756, 2
    %v758 = vadd.f32 %v756, %v757
    %v759 = vrot.slane %v758, 1
    %v760 = vadd.f32 %v758, %v759
    %v761 = vmul.f32 %v740, 0.125
    %v762 = vmul.f32 %v746, 0.125
    %v763 = vmul.f32 %v754, 0.125
    %v764 = vmul.f32 %v760, 0.125
    %v765 = vmul.f32 %v761, %v761
    %v766 = vmul.f32 %v762, %v762
    %v767 = vsub.f32 %v763, %v765
    %v768 = vsub.f32 %v764, %v766
    %v769 = vld [vmem:[%s3] sm:$0x3]
    %v770 = vadd.f32 %v767, 1e-05
    %v771 = vadd.f32 %v768, 1e-05
    %v772 = vrsqrt.pop %v770
    %v773 = vrsqrt.pop %v771
    %v776 = vcombine.low %v772, %v773
    %v778 = vunpack.c.l.s4 1966171168
    %v779 = vunpack.c.0.s8 %v778
    %v780 = vlaneseq
    %v781 = vshrl.u32 %v780, 7
    %v782 = vsub.s32 %v779, %v781
    %v783 = vrot.slane %v776, %v782
    %v785 = vunpack.c.l.s4 1966171168
    %v786 = vunpack.c.0.s8 %v785
    %v787 = vlaneseq
    %v788 = vshrl.u32 %v787, 7
    %v789 = vsub.s32 %v786, %v788
    %v790 = vrot.slane %v783, %v789
    %v792 = vmul.f32 %v769, %v790
    %v793 = vld [vmem:[%s4] sm:$0x3]
    %v795 = vlaneseq
    %v796 = vshrl.u32 %v795, 7
    %v797 = vsub.s32 0, %v796
    %v798 = vrot.slane %v792, %v797
    %v799 = vlaneseq
    %v800 = vshrl.u32 %v799, 7
    %v801 = vsub.s32 1, %v800
    %v802 = vrot.slane %v792, %v801
    %v805 = vmul.f32 %v761, %v798
    %v806 = vmul.f32 %v762, %v802
    %v809 = vcombine.low %v805, %v806
    %v811 = vunpack.c.l.s4 1966171168
    %v812 = vunpack.c.0.s8 %v811
    %v813 = vlaneseq
    %v814 = vshrl.u32 %v813, 7
    %v815 = vsub.s32 %v812, %v814
    %v816 = vrot.slane %v809, %v815
    %v818 = vunpack.c.l.s4 1966171168
    %v819 = vunpack.c.0.s8 %v818
    %v820 = vlaneseq
    %v821 = vshrl.u32 %v820, 7
    %v822 = vsub.s32 %v819, %v821
    %v823 = vrot.slane %v816, %v822
    %v825 = vsub.f32 %v793, %v823
    %v826 = vmul.f32 %v733, %v798
    %v827 = vmul.f32 %v734, %v802
    %v829 = vlaneseq
    %v830 = vshrl.u32 %v829, 7
    %v831 = vsub.s32 0, %v830
    %v832 = vrot.slane %v825, %v831
    %v833 = vlaneseq
    %v834 = vshrl.u32 %v833, 7
    %v835 = vsub.s32 1, %v834
    %v836 = vrot.slane %v825, %v835
    %v839 = vadd.f32 %v826, %v832
    %v840 = vadd.f32 %v827, %v836
    %v841 = vmax.f32 %v839, 0.0
    %v842 = vmax.f32 %v840, 0.0
    %843 = vst [vmem:[#allocation2] sm:$0xff] %v841
    %844 = vst [vmem:[#allocation2 + $0x8] sm:$0xff] %v842
    // Predicated region
    $region22: #{tpu_custom_call.1} parent=1 // pred_check
      _
    $region23: #{tpu_custom_call.1} parent=1 // pred_check_branch
      %846 = sbr.rel (0) target = $region25
    $region24: #{tpu_custom_call.1} parent=1 // pred_region
      %s848 = ssub.s32 256, 256
      %849 = vsyncadd [#allocation3], %s848
      %s851 = sshll.u32 [#allocation2], 4
      %s852 = int_to_ptr.vmem [resolvable:$true] %s851
      %854 = dma.vmem_to_hbm [thread:$0]  %s852, 256, %s5, [#allocation3]
    $region25: #{tpu_custom_call.1} parent=1 // pred_fallthru
      _
    // Predicated region
    $region26: #{tpu_custom_call.1} parent=1 // pred_check
      _
    $region27: #{tpu_custom_call.1} parent=1 // pred_check_branch
      %856 = sbr.rel (0) target = $region29
    $region28: #{tpu_custom_call.1} parent=1 // pred_region
      %857 = dma.done [#allocation3], 256
    $region29: #{tpu_custom_call.1} parent=1 // pred_fallthru
      _
    %858 = vsyncpa [#allocation3], 1

</llo_original>
